<compile_context>
chip_gen: v5e
topology: v5e:2x2
jax: 0.10.0
libtpu: 0.0.40
codegen_flags: <defaults>
</compile_context>

<pallas_src>
import functools

import jax
import jax.numpy as jnp
from jax.experimental import pallas as pl
from jax.experimental.pallas import tpu as pltpu

THRESHOLD = 0.5
EPS = 1e-6


def _dice_sums_kernel(rec_ref, tgt_ref, sums_ref, *, threshold, hw, mask_tail):
    """Accumulate dice partial sums per (batch*channel) row over spatial tiles.

    rec_ref/tgt_ref block: (Rt, T)   -- Rt rows (sublanes), T lane-dense spatial tile
    sums_ref block:        (Rt, 4)   -- columns [inter_gt, union_gt, inter_lt, union_lt]
    """
    s = pl.program_id(1)  # spatial reduction step (last grid axis, "arbitrary")

    @pl.when(s == 0)
    def _init():
        sums_ref[...] = jnp.zeros_like(sums_ref)

    rec = rec_ref[...]  # (Rt, T) native dtype (f32 or bf16)
    tgt = tgt_ref[...]

    if mask_tail:
        # Last spatial block may be padded; clamp padded lanes onto the
        # threshold so they count in neither direction.
        t = rec.shape[-1]
        lane = jax.lax.broadcasted_iota(jnp.int32, rec.shape, 1)
        valid = (s * t + lane) < hw
        rec = jnp.where(valid, rec, threshold)
        tgt = jnp.where(valid, tgt, threshold)

    f32 = jnp.float32
    rec_gt = (rec > threshold).astype(f32)
    tgt_gt = (tgt > threshold).astype(f32)
    rec_lt = (rec < threshold).astype(f32)
    tgt_lt = (tgt < threshold).astype(f32)

    inter_gt = jnp.sum(rec_gt * tgt_gt, axis=-1, keepdims=True)  # (Rt, 1)
    union_gt = jnp.sum(rec_gt + tgt_gt, axis=-1, keepdims=True)
    inter_lt = jnp.sum(rec_lt * tgt_lt, axis=-1, keepdims=True)
    union_lt = jnp.sum(rec_lt + tgt_lt, axis=-1, keepdims=True)

    sums_ref[:, 0:1] += inter_gt
    sums_ref[:, 1:2] += union_gt
    sums_ref[:, 2:3] += inter_lt
    sums_ref[:, 3:4] += union_lt


def _pick_spatial_tile(hw, rows, itemsize, max_tile_bytes=6 * 1024 * 1024):
    """Spatial tile T (lane axis).  Full extent when it fits the per-buffer byte
    budget, otherwise the largest multiple of 128 under the budget; the grid
    then uses cdiv(hw, T) with an in-kernel tail mask."""
    cap_elems = max_tile_bytes // max(1, rows * itemsize)
    if hw <= max(cap_elems, 128):
        return hw
    return max(128, (cap_elems // 128) * 128)


def _pick_row_chunk(rows, hw, itemsize):
    """Split the parallel row axis in two when each half still streams >=1 MiB
    per spatial pass (gives v7x's second TensorCore work; harmless on 1-TC
    parts)."""
    half = rows // 2
    if rows >= 16 and rows % 16 == 0 and half * hw * itemsize >= (1 << 20):
        return half
    return rows


def dice_score_loss(reconstructed, target, threshold=THRESHOLD,
                    spatial_tile=None, row_chunk=None):
    """Pallas implementation of DiceScoreLoss.forward.  Inputs: (B, C, H, W)."""
    B, C, H, W = reconstructed.shape
    assert target.shape == reconstructed.shape
    HW = H * W
    R = B * C

    # Free layout plumbing: sublane axis = B*C, lane axis = H*W.
    rec = reconstructed.reshape(R, HW)
    tgt = target.reshape(R, HW)

    itemsize = jnp.dtype(reconstructed.dtype).itemsize

    Rt = row_chunk if row_chunk is not None else _pick_row_chunk(R, HW, itemsize)
    assert R % Rt == 0 and (Rt % 8 == 0 or Rt == R), (R, Rt)

    T = spatial_tile if spatial_tile is not None else _pick_spatial_tile(HW, Rt, itemsize)
    assert T == HW or T % 128 == 0, (HW, T)
    n_r = R // Rt
    n_s = pl.cdiv(HW, T)
    mask_tail = (HW % T) != 0

    kernel = functools.partial(
        _dice_sums_kernel, threshold=threshold, hw=HW, mask_tail=mask_tail)

    n_elems = R * HW
    cost = pl.CostEstimate(
        flops=8 * n_elems,  # 4 compares + 2 mul/add + reduction adds (approx)
        transcendentals=0,
        bytes_accessed=2 * n_elems * itemsize + R * 4 * 4,
    )

    sums = pl.pallas_call(
        kernel,
        out_shape=jax.ShapeDtypeStruct((R, 4), jnp.float32),
        grid_spec=pltpu.PrefetchScalarGridSpec(
            num_scalar_prefetch=0,
            grid=(n_r, n_s),  # reduction (spatial) axis last
            in_specs=[
                pl.BlockSpec((Rt, T), lambda r, s: (r, s)),
                pl.BlockSpec((Rt, T), lambda r, s: (r, s)),
            ],
            out_specs=pl.BlockSpec((Rt, 4), lambda r, s: (r, 0)),
        ),
        compiler_params=pltpu.CompilerParams(
            dimension_semantics=("parallel", "arbitrary"),
            vmem_limit_bytes=32 * 1024 * 1024,
        ),
        cost_estimate=cost,
    )(rec, tgt)

    # Tiny finalization in plain JAX: dice per (batch, channel, direction),
    # mean over the 2*C scores, then mean over batch.
    sums = sums.reshape(B, C, 4)
    dice_gt = (2.0 * sums[..., 0] + EPS) / (sums[..., 1] + EPS)   # (B, C)
    dice_lt = (2.0 * sums[..., 2] + EPS) / (sums[..., 3] + EPS)   # (B, C)
    all_scores = jnp.concatenate([dice_gt, dice_lt], axis=1)      # (B, 2C)
    avg_dice_score = jnp.mean(all_scores, axis=1)                 # (B,)
    return 1.0 - jnp.mean(avg_dice_score)                         # scalar


def _reference_jax(reconstructed, target, threshold=THRESHOLD):
    """Pure-JAX reference mirroring the PyTorch module, for sanity checking."""
    def dice_dir(rec_bin, tgt_bin):
        inter = jnp.sum(rec_bin * tgt_bin, axis=(2, 3))    # (B, C)
        union = jnp.sum(rec_bin, axis=(2, 3)) + jnp.sum(tgt_bin, axis=(2, 3))
        return (2.0 * inter + EPS) / (union + EPS)         # (B, C)

    d_gt = dice_dir((reconstructed > threshold).astype(jnp.float32),
                    (target > threshold).astype(jnp.float32))
    d_lt = dice_dir((reconstructed < threshold).astype(jnp.float32),
                    (target < threshold).astype(jnp.float32))
    all_scores = jnp.concatenate([d_gt, d_lt], axis=1)     # (B, 2C)
    avg = jnp.mean(all_scores, axis=1)                     # (B,)
    return 1.0 - jnp.mean(avg)


if __name__ == "__main__":
    key = jax.random.PRNGKey(0)
    k1, k2, k3, k4, k5, k6 = jax.random.split(key, 6)

    loss_fn = jax.jit(dice_score_loss,
                      static_argnames=("threshold", "spatial_tile", "row_chunk"))

    # Test 1: primary small shape (single spatial tile): B=2, C=4, 16x16.
    B, C, H, W = 2, 4, 16, 16
    rec = jax.random.uniform(k1, (B, C, H, W), dtype=jnp.float32)
    tgt = jax.random.uniform(k2, (B, C, H, W), dtype=jnp.float32)
    loss = jax.block_until_ready(loss_fn(rec, tgt))
    ref = _reference_jax(rec, tgt)
    assert jnp.allclose(loss, ref, atol=1e-6, rtol=1e-6), (loss, ref)

    # Test 2: multi-tile accumulator + tail mask (HW=400, T=128 -> 4 blocks,
    # last block padded by 112 lanes).
    H2 = W2 = 20
    rec2 = jax.random.uniform(k3, (B, C, H2, W2), dtype=jnp.float32)
    tgt2 = jax.random.uniform(k4, (B, C, H2, W2), dtype=jnp.float32)
    loss2 = jax.block_until_ready(loss_fn(rec2, tgt2, spatial_tile=128))
    ref2 = _reference_jax(rec2, tgt2)
    assert jnp.allclose(loss2, ref2, atol=1e-6, rtol=1e-6), (loss2, ref2)

    # Test 3: row-chunked parallel axis (R=16 split into two chunks of 8) plus
    # a 4-step spatial reduction without tail.
    B3, C3, H3, W3 = 4, 4, 32, 32
    rec3 = jax.random.uniform(k5, (B3, C3, H3, W3), dtype=jnp.float32)
    tgt3 = jax.random.uniform(k6, (B3, C3, H3, W3), dtype=jnp.float32)
    loss3 = jax.block_until_ready(loss_fn(rec3, tgt3, spatial_tile=256, row_chunk=8))
    ref3 = _reference_jax(rec3, tgt3)
    assert jnp.allclose(loss3, ref3, atol=1e-6, rtol=1e-6), (loss3, ref3)

    print("KERNEL_OK")
</pallas_src>

<mosaic_0001>
module attributes {stable_mosaic.version = 11 : i64} {
  func.func @_dice_sums_kernel(%arg0: i32, %arg1: i32, %arg2: memref<8x256xf32, #tpu.memory_space<vmem>>, %arg3: memref<8x256xf32, #tpu.memory_space<vmem>>, %arg4: memref<8x4xf32, #tpu.memory_space<vmem>>) attributes {dimension_semantics = [#tpu.dimension_semantics<parallel>, #tpu.dimension_semantics<arbitrary>], iteration_bounds = array<i64: 1, 1>, scalar_prefetch = 0 : i64, scratch_operands = 0 : i64, tpu.core_type = #tpu.core_type<tc>, window_params = [{transform_indices = @transform_0, window_bounds = array<i64: 8, 256>}, {transform_indices = @transform_1, window_bounds = array<i64: 8, 256>}, {transform_indices = @transform_2, window_bounds = array<i64: 8, 4>}]} {
    %c0_i32 = arith.constant 0 : i32
    %0 = arith.cmpi eq, %arg1, %c0_i32 : i32
    %1 = arith.extui %0 : i1 to i32
    %c0_i32_0 = arith.constant 0 : i32
    %2 = arith.cmpi ne, %1, %c0_i32_0 : i32
    scf.if %2 {
      %cst_24 = arith.constant 0.000000e+00 : f32
      %45 = vector.broadcast %cst_24 : f32 to vector<8x4xf32>
      %c0_25 = arith.constant 0 : index
      %c0_26 = arith.constant 0 : index
      %46 = vector.load %arg4[%c0_25, %c0_26] : memref<8x4xf32, #tpu.memory_space<vmem>>, vector<8x4xf32>
      tpu.vector_store %arg4[%c0_25, %c0_26], %45 {strides = array<i32>} : memref<8x4xf32, #tpu.memory_space<vmem>>, vector<8x4xf32>,
    } else {
    }
    %c0 = arith.constant 0 : index
    %c0_1 = arith.constant 0 : index
    %3 = vector.load %arg2[%c0, %c0_1] : memref<8x256xf32, #tpu.memory_space<vmem>>, vector<8x256xf32>
    %c0_2 = arith.constant 0 : index
    %c0_3 = arith.constant 0 : index
    %4 = vector.load %arg3[%c0_2, %c0_3] : memref<8x256xf32, #tpu.memory_space<vmem>>, vector<8x256xf32>
    %cst = arith.constant 5.000000e-01 : f32
    %5 = vector.broadcast %cst : f32 to vector<8x256xf32>
    %6 = arith.cmpf ogt, %3, %5 : vector<8x256xf32>
    %7 = arith.extui %6 : vector<8x256xi1> to vector<8x256xi32>
    %8 = arith.sitofp %7 : vector<8x256xi32> to vector<8x256xf32>
    %cst_4 = arith.constant 5.000000e-01 : f32
    %9 = vector.broadcast %cst_4 : f32 to vector<8x256xf32>
    %10 = arith.cmpf ogt, %4, %9 : vector<8x256xf32>
    %11 = arith.extui %10 : vector<8x256xi1> to vector<8x256xi32>
    %12 = arith.sitofp %11 : vector<8x256xi32> to vector<8x256xf32>
    %cst_5 = arith.constant 5.000000e-01 : f32
    %13 = vector.broadcast %cst_5 : f32 to vector<8x256xf32>
    %14 = arith.cmpf olt, %3, %13 : vector<8x256xf32>
    %15 = arith.extui %14 : vector<8x256xi1> to vector<8x256xi32>
    %16 = arith.sitofp %15 : vector<8x256xi32> to vector<8x256xf32>
    %cst_6 = arith.constant 5.000000e-01 : f32
    %17 = vector.broadcast %cst_6 : f32 to vector<8x256xf32>
    %18 = arith.cmpf olt, %4, %17 : vector<8x256xf32>
    %19 = arith.extui %18 : vector<8x256xi1> to vector<8x256xi32>
    %20 = arith.sitofp %19 : vector<8x256xi32> to vector<8x256xf32>
    %21 = arith.mulf %8, %12 : vector<8x256xf32>
    %cst_7 = arith.constant dense<0.000000e+00> : vector<8xf32>
    %22 = vector.multi_reduction <add>, %21, %cst_7 [1] : vector<8x256xf32> to vector<8xf32>
    %23 = vector.shape_cast %22 : vector<8xf32> to vector<8x1xf32>
    %24 = arith.addf %8, %12 : vector<8x256xf32>
    %cst_8 = arith.constant dense<0.000000e+00> : vector<8xf32>
    %25 = vector.multi_reduction <add>, %24, %cst_8 [1] : vector<8x256xf32> to vector<8xf32>
    %26 = vector.shape_cast %25 : vector<8xf32> to vector<8x1xf32>
    %27 = arith.mulf %16, %20 : vector<8x256xf32>
    %cst_9 = arith.constant dense<0.000000e+00> : vector<8xf32>
    %28 = vector.multi_reduction <add>, %27, %cst_9 [1] : vector<8x256xf32> to vector<8xf32>
    %29 = vector.shape_cast %28 : vector<8xf32> to vector<8x1xf32>
    %30 = arith.addf %16, %20 : vector<8x256xf32>
    %cst_10 = arith.constant dense<0.000000e+00> : vector<8xf32>
    %31 = vector.multi_reduction <add>, %30, %cst_10 [1] : vector<8x256xf32> to vector<8xf32>
    %32 = vector.shape_cast %31 : vector<8xf32> to vector<8x1xf32>
    %c0_11 = arith.constant 0 : index
    %c0_12 = arith.constant 0 : index
    %33 = vector.load %arg4[%c0_11, %c0_12] : memref<8x4xf32, #tpu.memory_space<vmem>>, vector<8x1xf32>
    %34 = arith.addf %33, %23 : vector<8x1xf32>
    %c0_13 = arith.constant 0 : index
    %c0_14 = arith.constant 0 : index
    %35 = vector.load %arg4[%c0_13, %c0_14] : memref<8x4xf32, #tpu.memory_space<vmem>>, vector<8x1xf32>
    tpu.vector_store %arg4[%c0_13, %c0_14], %34 {strides = array<i32>} : memref<8x4xf32, #tpu.memory_space<vmem>>, vector<8x1xf32>,
    %c0_15 = arith.constant 0 : index
    %c1 = arith.constant 1 : index
    %36 = vector.load %arg4[%c0_15, %c1] : memref<8x4xf32, #tpu.memory_space<vmem>>, vector<8x1xf32>
    %37 = arith.addf %36, %26 : vector<8x1xf32>
    %c0_16 = arith.constant 0 : index
    %c1_17 = arith.constant 1 : index
    %38 = vector.load %arg4[%c0_16, %c1_17] : memref<8x4xf32, #tpu.memory_space<vmem>>, vector<8x1xf32>
    tpu.vector_store %arg4[%c0_16, %c1_17], %37 {strides = array<i32>} : memref<8x4xf32, #tpu.memory_space<vmem>>, vector<8x1xf32>,
    %c0_18 = arith.constant 0 : index
    %c2 = arith.constant 2 : index
    %39 = vector.load %arg4[%c0_18, %c2] : memref<8x4xf32, #tpu.memory_space<vmem>>, vector<8x1xf32>
    %40 = arith.addf %39, %29 : vector<8x1xf32>
    %c0_19 = arith.constant 0 : index
    %c2_20 = arith.constant 2 : index
    %41 = vector.load %arg4[%c0_19, %c2_20] : memref<8x4xf32, #tpu.memory_space<vmem>>, vector<8x1xf32>
    tpu.vector_store %arg4[%c0_19, %c2_20], %40 {strides = array<i32>} : memref<8x4xf32, #tpu.memory_space<vmem>>, vector<8x1xf32>,
    %c0_21 = arith.constant 0 : index
    %c3 = arith.constant 3 : index
    %42 = vector.load %arg4[%c0_21, %c3] : memref<8x4xf32, #tpu.memory_space<vmem>>, vector<8x1xf32>
    %43 = arith.addf %42, %32 : vector<8x1xf32>
    %c0_22 = arith.constant 0 : index
    %c3_23 = arith.constant 3 : index
    %44 = vector.load %arg4[%c0_22, %c3_23] : memref<8x4xf32, #tpu.memory_space<vmem>>, vector<8x1xf32>
    tpu.vector_store %arg4[%c0_22, %c3_23], %43 {strides = array<i32>} : memref<8x4xf32, #tpu.memory_space<vmem>>, vector<8x1xf32>,
    return
  }
  func.func @transform_0(%arg0: i32, %arg1: i32) -> (i32, i32) {
    %c0_i32 = arith.constant 0 : i32
    return %arg0, %arg1 : i32, i32
  }
  func.func @transform_1(%arg0: i32, %arg1: i32) -> (i32, i32) {
    %c0_i32 = arith.constant 0 : i32
    return %arg0, %arg1 : i32, i32
  }
  func.func @transform_2(%arg0: i32, %arg1: i32) -> (i32, i32) {
    %c0_i32 = arith.constant 0 : i32
    %c0_i32_0 = arith.constant 0 : i32
    return %arg0, %c0_i32 : i32, i32
  }
}

</mosaic_0001>

<llo_original>
// kernel: dice_score_loss.1
$region0: #{dice_score_loss.1}
  #allocation0 [shape = 'u32[]', space=smem, size = 0x4, offset = 0x4, fixed_abs, tag = 'smem constant byte address 0x4 - core index']
  #allocation1 [shape = 'u32[72,128]{1,0:T(1,128)}', space=vmem, size = 0x9000, scoped, tag = 'internal scratch']
  %s0 = inlined_call_operand.vmem [shape: f32[8,256], index: 0, kind: input, shape index: {}]
  %s1 = inlined_call_operand.vmem [shape: f32[8,256], index: 1, kind: input, shape index: {}]
  %s2 = inlined_call_operand.vmem [shape: f32[8,4], index: 2, kind: output, shape index: {}]
  %s3 = sld [smem:[#allocation0]]
  $region22: #{dice_score_loss.1} parent=0
    _
  %s5 = ssub.s32 1, %s3
  %s6 = scalar_select 0, %s5, %s3
  // Predicated region
  $region2: #{dice_score_loss.1} parent=0 // pred_check
    _
  $region3: #{dice_score_loss.1} parent=0 // pred_check_branch
    %8 = sbr.rel (0) target = $region5
  $region4: #{dice_score_loss.1} parent=0 // pred_region
    _
  $region5: #{dice_score_loss.1} parent=0 // pred_fallthru
    _
  // Predicated region
  $region6: #{dice_score_loss.1} parent=0 // pred_check
    _
  $region7: #{dice_score_loss.1} parent=0 // pred_check_branch
    %10 = sbr.rel (0) target = $region9
  $region8: #{dice_score_loss.1} parent=0 // pred_region
    _
  $region9: #{dice_score_loss.1} parent=0 // pred_fallthru
    _
  %p11 = scmp.eq.s32.totalorder 0, 0
  // Predicated region
  $region10: #{dice_score_loss.1} parent=0 // pred_check
    %p12 = pneg %p11
  $region11: #{dice_score_loss.1} parent=0 // pred_check_branch
    %14 = sbr.rel (%p12) target = $region13
  $region12: #{dice_score_loss.1} parent=0 // pred_region
    %vm15 = vcmask 31744
    %16 = vst.msk [vmem:[%s2] sm:$0xff] %vm15, 0.0
  $region13: #{dice_score_loss.1} parent=0 // pred_fallthru
    _
  %v17 = vld [vmem:[%s0] sm:$0xff]
  %v18 = vld [vmem:[%s0 + $0x8] sm:$0xff]
  %v19 = vld [vmem:[%s1] sm:$0xff]
  %v20 = vld [vmem:[%s1 + $0x8] sm:$0xff]
  %vm21 = vcmp.gt.f32.partialorder %v17, 0.5
  %vm22 = vcmp.gt.f32.partialorder %v18, 0.5
  %v23 = vsel %vm21, 1, 0
  %v24 = vsel %vm22, 1, 0
  %v25 = vcvt.s32.f32 %v23
  %v26 = vcvt.s32.f32 %v24
  %vm27 = vcmp.gt.f32.partialorder %v19, 0.5
  %vm28 = vcmp.gt.f32.partialorder %v20, 0.5
  %v29 = vsel %vm27, 1, 0
  %v30 = vsel %vm28, 1, 0
  %v31 = vcvt.s32.f32 %v29
  %v32 = vcvt.s32.f32 %v30
  %vm33 = vcmp.lt.f32.partialorder %v17, 0.5
  %vm34 = vcmp.lt.f32.partialorder %v18, 0.5
  %v35 = vsel %vm33, 1, 0
  %v36 = vsel %vm34, 1, 0
  %v37 = vcvt.s32.f32 %v35
  %v38 = vcvt.s32.f32 %v36
  %vm39 = vcmp.lt.f32.partialorder %v19, 0.5
  %vm40 = vcmp.lt.f32.partialorder %v20, 0.5
  %v41 = vsel %vm39, 1, 0
  %v42 = vsel %vm40, 1, 0
  %v43 = vcvt.s32.f32 %v41
  %v44 = vcvt.s32.f32 %v42
  %v45 = vmul.f32 %v25, %v31
  %v46 = vmul.f32 %v26, %v32
  %v47 = vadd.f32 %v45, %v46
  %48 = vadd.xlane.f32.xlu0 %v47
  %v49 = vpop.xlane.xlu0 %48
  %v50 = vadd.f32 %v25, %v31
  %v51 = vadd.f32 %v26, %v32
  %v52 = vadd.f32 %v50, %v51
  %53 = vadd.xlane.f32.xlu0 %v52
  %v54 = vpop.xlane.xlu0 %53
  %v55 = vmul.f32 %v37, %v43
  %v56 = vmul.f32 %v38, %v44
  %v57 = vadd.f32 %v55, %v56
  %58 = vadd.xlane.f32.xlu0 %v57
  %v59 = vpop.xlane.xlu0 %58
  %v60 = vadd.f32 %v37, %v43
  %v61 = vadd.f32 %v38, %v44
  %v62 = vadd.f32 %v60, %v61
  %63 = vadd.xlane.f32.xlu0 %v62
  %v64 = vpop.xlane.xlu0 %63
  %v65 = vld [vmem:[%s2] sm:$0xff]
  %v66 = vadd.f32 %v65, %v49
  %vm67 = vcmask 7168
  %68 = vst.msk [vmem:[%s2] sm:$0xff] %vm67, %v66
  %v69 = vld [vmem:[%s2] sm:$0xff]
  %v70 = vadd.f32 %v69, %v54
  %vm71 = vcmask 15368
  %72 = vst.msk [vmem:[%s2] sm:$0xff] %vm71, %v70
  %v73 = vld [vmem:[%s2] sm:$0xff]
  %v74 = vadd.f32 %v73, %v59
  %vm75 = vcmask 23568
  %76 = vst.msk [vmem:[%s2] sm:$0xff] %vm75, %v74
  %v77 = vld [vmem:[%s2] sm:$0xff]
  %v78 = vadd.f32 %v77, %v64
  %vm79 = vcmask 31768
  %80 = vst.msk [vmem:[%s2] sm:$0xff] %vm79, %v78
  // Predicated region
  $region14: #{dice_score_loss.1} parent=0 // pred_check
    _
  $region15: #{dice_score_loss.1} parent=0 // pred_check_branch
    %82 = sbr.rel (0) target = $region17
  $region16: #{dice_score_loss.1} parent=0 // pred_region
    _
  $region17: #{dice_score_loss.1} parent=0 // pred_fallthru
    _
  // Predicated region
  $region18: #{dice_score_loss.1} parent=0 // pred_check
    _
  $region19: #{dice_score_loss.1} parent=0 // pred_check_branch
    %84 = sbr.rel (0) target = $region21
  $region20: #{dice_score_loss.1} parent=0 // pred_region
    _
  $region21: #{dice_score_loss.1} parent=0 // pred_fallthru
    _

</llo_original>
